<compile_context>
chip_gen: v6e
topology: v6e:2x2x1
jax: 0.10.0
libtpu: 0.0.40
codegen_flags: <defaults>
</compile_context>

<pallas_src>
import jax
import jax.numpy as jnp
from jax import lax
from jax.experimental import pallas as pl
from jax.experimental.pallas import tpu as pltpu

_LANE = 128
_TARGET_BLOCK_BYTES = 8 * 1024 * 1024   # ~8 MiB of input per grid step
_MIN_SPLIT_BYTES = 4 * 1024 * 1024      # don't split v7x blocks below ~4 MiB halves
_C_CHUNK = 8                            # channels reduced per unrolled step


def _squash_norm_kernel(x_ref, o_ref):
    # x_ref: (tb, C, ts, 128) or (tb, C, tcols) block in VMEM
    # o_ref: (tb, 1, ts, 128) or (tb, 1, tcols)
    C = x_ref.shape[1]
    acc = jnp.zeros(o_ref.shape, jnp.float32)
    # Unrolled loop over <=8-channel slabs keeps f32 temporaries small even
    # for low-precision inputs; reduction stays a plain VPU add pattern.
    for c0 in range(0, C, _C_CHUNK):
        c1 = min(c0 + _C_CHUNK, C)
        xs = x_ref[:, c0:c1]
        if xs.dtype != jnp.float32:
            xs = xs.astype(jnp.float32)
        acc = acc + jnp.sum(xs * xs, axis=1, keepdims=True)
    # (1 + n^2)/n == (1 + sumsq) * rsqrt(sumsq): single EUP op, no sqrt->div.
    o_ref[...] = ((1.0 + acc) * lax.rsqrt(acc)).astype(o_ref.dtype)


def _compiler_params():
    return pltpu.CompilerParams(
        dimension_semantics=("parallel", "parallel"),
        # 32 MiB: above v5e's 16 MiB default scoped VMEM, equal to v6e/v7x
        # defaults, and within every generation's physical VMEM.
        vmem_limit_bytes=32 * 1024 * 1024,
    )


def _is_multi_tensorcore_chip():
    """Heuristic: only v7x-class chips have 2 TensorCores per device."""
    try:
        kind = jax.devices()[0].device_kind.lower()
    except Exception:
        return False
    return "7" in kind


def _pick_tile(extent, unit, budget_units):
    """Largest legal tile: either the full extent (always a legal block dim)
    or a multiple of `unit` that is <= budget_units (and <= extent)."""
    if extent <= unit or extent <= budget_units:
        return extent
    return max(unit, (min(budget_units, extent) // unit) * unit)


def _maybe_split_for_two_cores(tb, sp_tile, sp_unit, B, sp_extent, block_bytes):
    """On multi-TC chips, ensure >= 2 grid steps when the whole problem would
    otherwise be a single block -- but never drop a half below ~4 MiB."""
    if pl.cdiv(B, tb) * pl.cdiv(sp_extent, sp_tile) > 1:
        return tb, sp_tile
    if block_bytes < 2 * _MIN_SPLIT_BYTES:
        return tb, sp_tile
    # Prefer splitting the spatial axis (also handles B == 1).
    half = -(-sp_tile // (2 * sp_unit)) * sp_unit
    if 0 < half < sp_tile:
        return tb, half
    if B > 1:
        return -(-tb // 2), sp_tile
    return tb, sp_tile


def squashing_norm(x):
    """x: (B, C, H, W) -> (B, 1, H, W), matching PyTorch Squashing.forward."""
    B, C, H, W = x.shape
    HW = H * W
    itemsize = jnp.dtype(x.dtype).itemsize
    smult = max(8, 32 // itemsize)      # dtype-aware sublane multiple
    multi_tc = _is_multi_tensorcore_chip()
    params = _compiler_params()

    if HW % _LANE == 0 and HW > 0:
        # Fast path: lane-dense 4-D layout, reduction over a leading block axis.
        ns = HW // _LANE
        xr = x.reshape(B, C, ns, _LANE)
        row_bytes = C * _LANE * itemsize                   # one (1,C,1,128) slab
        ts = _pick_tile(ns, smult, max(1, _TARGET_BLOCK_BYTES // row_bytes))
        tb = _pick_tile(B, 1, max(1, _TARGET_BLOCK_BYTES // (row_bytes * ts)))
        if multi_tc:
            tb, ts = _maybe_split_for_two_cores(
                tb, ts, smult, B, ns, tb * ts * row_bytes)
        grid = (pl.cdiv(B, tb), pl.cdiv(ns, ts))

        out = pl.pallas_call(
            _squash_norm_kernel,
            out_shape=jax.ShapeDtypeStruct((B, 1, ns, _LANE), x.dtype),
            grid_spec=pl.GridSpec(
                grid=grid,
                in_specs=[pl.BlockSpec((tb, C, ts, _LANE),
                                       lambda i, j: (i, 0, j, 0))],
                out_specs=pl.BlockSpec((tb, 1, ts, _LANE),
                                       lambda i, j: (i, 0, j, 0)),
            ),
            compiler_params=params,
        )(xr)
        return out.reshape(B, 1, H, W)

    # Ragged path (H*W not a multiple of 128): 3-D layout, 128-column tiles,
    # Pallas masks the partial last block -- no host-side pad/slice copies.
    xr = x.reshape(B, C, HW)
    col_bytes = C * itemsize
    tcols = _pick_tile(HW, _LANE, max(1, _TARGET_BLOCK_BYTES // col_bytes))
    tb = _pick_tile(B, 1, max(1, _TARGET_BLOCK_BYTES // (col_bytes * tcols)))
    if multi_tc:
        tb, tcols = _maybe_split_for_two_cores(
            tb, tcols, _LANE, B, HW, tb * tcols * col_bytes)
    grid = (pl.cdiv(B, tb), pl.cdiv(HW, tcols))

    out = pl.pallas_call(
        _squash_norm_kernel,
        out_shape=jax.ShapeDtypeStruct((B, 1, HW), x.dtype),
        grid_spec=pl.GridSpec(
            grid=grid,
            in_specs=[pl.BlockSpec((tb, C, tcols), lambda i, j: (i, 0, j))],
            out_specs=pl.BlockSpec((tb, 1, tcols), lambda i, j: (i, 0, j)),
        ),
        compiler_params=params,
    )(xr)
    return out.reshape(B, 1, H, W)


def _reference(x):
    # Mirrors torch.norm(x, 2, dim=1, keepdim=True); (1 + n^2) / n.
    n = jnp.sqrt(jnp.sum(x * x, axis=1, keepdims=True))
    return (1.0 + n * n) / n


if __name__ == "__main__":
    key = jax.random.PRNGKey(0)

    # Primary case (lane-aligned fast path): (B=2, C=4, H=16, W=16).
    x = jax.random.normal(key, (2, 4, 16, 16), dtype=jnp.float32)
    out = jax.block_until_ready(squashing_norm(x))
    ref = _reference(x)
    assert out.shape == (2, 1, 16, 16), out.shape
    assert jnp.allclose(out, ref, rtol=1e-5, atol=1e-5), "mismatch vs reference"

    # Ragged case (H*W not a multiple of 128): exercises the no-pad 3-D path.
    x2 = jax.random.normal(jax.random.PRNGKey(1), (2, 4, 6, 6), dtype=jnp.float32)
    out2 = jax.block_until_ready(squashing_norm(x2))
    ref2 = _reference(x2)
    assert out2.shape == (2, 1, 6, 6), out2.shape
    assert jnp.allclose(out2, ref2, rtol=1e-5, atol=1e-5), "mismatch vs reference (ragged)"

    print("KERNEL_OK")
</pallas_src>

<mosaic_0001>
module attributes {stable_mosaic.version = 11 : i64} {
  func.func @_squash_norm_kernel(%arg0: i32, %arg1: i32, %arg2: memref<2x4x2x128xf32, #tpu.memory_space<vmem>>, %arg3: memref<2x1x2x128xf32, #tpu.memory_space<vmem>>) attributes {dimension_semantics = [#tpu.dimension_semantics<parallel>, #tpu.dimension_semantics<parallel>], iteration_bounds = array<i64: 1, 1>, scalar_prefetch = 0 : i64, scratch_operands = 0 : i64, tpu.core_type = #tpu.core_type<tc>, window_params = [{transform_indices = @transform_0, window_bounds = array<i64: 2, 4, 2, 128>}, {transform_indices = @transform_1, window_bounds = array<i64: 2, 1, 2, 128>}]} {
    %cst = arith.constant 0.000000e+00 : f32
    %0 = vector.broadcast %cst : f32 to vector<2x1x2x128xf32>
    %c0 = arith.constant 0 : index
    %c0_0 = arith.constant 0 : index
    %c0_1 = arith.constant 0 : index
    %c0_2 = arith.constant 0 : index
    %1 = vector.load %arg2[%c0, %c0_0, %c0_1, %c0_2] : memref<2x4x2x128xf32, #tpu.memory_space<vmem>>, vector<2x4x2x128xf32>
    %2 = arith.mulf %1, %1 : vector<2x4x2x128xf32>
    %cst_3 = arith.constant dense<0.000000e+00> : vector<2x2x128xf32>
    %3 = vector.multi_reduction <add>, %2, %cst_3 [1] : vector<2x4x2x128xf32> to vector<2x2x128xf32>
    %4 = vector.shape_cast %3 : vector<2x2x128xf32> to vector<2x1x2x128xf32>
    %5 = arith.addf %0, %4 : vector<2x1x2x128xf32>
    %cst_4 = arith.constant 1.000000e+00 : f32
    %6 = vector.broadcast %cst_4 : f32 to vector<2x1x2x128xf32>
    %7 = arith.addf %6, %5 : vector<2x1x2x128xf32>
    %8 = math.rsqrt %5 : vector<2x1x2x128xf32>
    %9 = arith.mulf %7, %8 : vector<2x1x2x128xf32>
    %c0_5 = arith.constant 0 : index
    %c0_6 = arith.constant 0 : index
    %c0_7 = arith.constant 0 : index
    %c0_8 = arith.constant 0 : index
    %10 = vector.load %arg3[%c0_5, %c0_6, %c0_7, %c0_8] : memref<2x1x2x128xf32, #tpu.memory_space<vmem>>, vector<2x1x2x128xf32>
    tpu.vector_store %arg3[%c0_5, %c0_6, %c0_7, %c0_8], %9 {strides = array<i32>} : memref<2x1x2x128xf32, #tpu.memory_space<vmem>>, vector<2x1x2x128xf32>,
    return
  }
  func.func @transform_0(%arg0: i32, %arg1: i32) -> (i32, i32, i32, i32) {
    %c0_i32 = arith.constant 0 : i32
    %c0_i32_0 = arith.constant 0 : i32
    %c0_i32_1 = arith.constant 0 : i32
    return %arg0, %c0_i32, %arg1, %c0_i32_0 : i32, i32, i32, i32
  }
  func.func @transform_1(%arg0: i32, %arg1: i32) -> (i32, i32, i32, i32) {
    %c0_i32 = arith.constant 0 : i32
    %c0_i32_0 = arith.constant 0 : i32
    %c0_i32_1 = arith.constant 0 : i32
    return %arg0, %c0_i32, %arg1, %c0_i32_0 : i32, i32, i32, i32
  }
}

</mosaic_0001>

<llo_original>
// kernel: tpu_custom_call.1
$region0: #{tpu_custom_call.1}
  #allocation0 [shape = 'u32[]', space=smem, size = 0x4, offset = 0x4, fixed_abs, tag = 'smem constant byte address 0x4 - core index']
  #allocation1 [shape = 'u32[144,128]{1,0:T(1,128)}', space=vmem, size = 0x12000, scoped, tag = 'internal scratch']
  %s0 = inlined_call_operand.hbm [shape: f32[2,4,2,128], index: 0, kind: input, shape index: {}]
  %s1 = inlined_call_operand.hbm [shape: f32[2,1,2,128], index: 1, kind: output, shape index: {}]
  %s2 = sld [smem:[#allocation0]]
  $region18: #{tpu_custom_call.1} parent=0
    _
  %s4 = ssub.s32 1, %s2
  %s5 = scalar_select 0, %s4, %s2
  $region1: #{tpu_custom_call.1} parent=0
    #allocation2 [shape = 'u8[8192]{0}', space=vmem, size = 0x2000, scoped, tag = 'input window, operand 0, single buffered']
    #allocation3 [shape = 's32[1]{0}', space=sflag, size = 0x4, scoped, tag = 'scoped memory for tpu_custom_call.1']
    #allocation4 [shape = 's32[1]{0}', space=sflag, size = 0x4, scoped, tag = 'scoped memory for tpu_custom_call.1']
    #allocation5 [shape = 'u8[2048]{0}', space=vmem, size = 0x800, scoped, tag = 'output window, operand 0, single buffered']
    %6 = vsyncpa [#allocation3], 0
    %7 = vsyncpa [#allocation4], 0
    // Predicated region
    $region2: #{tpu_custom_call.1} parent=1 // pred_check
      _
    $region3: #{tpu_custom_call.1} parent=1 // pred_check_branch
      %9 = sbr.rel (0) target = $region5
    $region4: #{tpu_custom_call.1} parent=1 // pred_region
      %s11 = ssub.s32 256, 256
      %12 = vsyncadd [#allocation3], %s11
      %s13 = sshll.u32 [#allocation2], 4
      %s14 = int_to_ptr.vmem [resolvable:$true] %s13
      %19 = dma.hbm_to_vmem [thread:$0]  %s0, 256, %s14, [#allocation3], 32, 32, 2
    $region5: #{tpu_custom_call.1} parent=1 // pred_fallthru
      _
    // Predicated region
    $region6: #{tpu_custom_call.1} parent=1 // pred_check
      _
    $region7: #{tpu_custom_call.1} parent=1 // pred_check_branch
      %21 = sbr.rel (0) target = $region9
    $region8: #{tpu_custom_call.1} parent=1 // pred_region
      %22 = dma.done [#allocation3], 256
    $region9: #{tpu_custom_call.1} parent=1 // pred_fallthru
      _
    %v23 = vld [vmem:[#allocation2] sm:$0x3]
    %v24 = vld [vmem:[#allocation2 + $0x2] sm:$0x3]
    %v25 = vld [vmem:[#allocation2 + $0x4] sm:$0x3]
    %v26 = vld [vmem:[#allocation2 + $0x6] sm:$0x3]
    %v27 = vld [vmem:[#allocation2 + $0x8] sm:$0x3]
    %v28 = vld [vmem:[#allocation2 + $0xa] sm:$0x3]
    %v29 = vld [vmem:[#allocation2 + $0xc] sm:$0x3]
    %v30 = vld [vmem:[#allocation2 + $0xe] sm:$0x3]
    %v31 = vmul.f32 %v23, %v23
    %v32 = vmul.f32 %v24, %v24
    %v33 = vmul.f32 %v25, %v25
    %v34 = vmul.f32 %v26, %v26
    %v35 = vmul.f32 %v27, %v27
    %v36 = vmul.f32 %v28, %v28
    %v37 = vmul.f32 %v29, %v29
    %v38 = vmul.f32 %v30, %v30
    %vm39 = vcmask 1041408
    %v40 = vsel %vm39, %v31, 0.0
    %v41 = vsel %vm39, %v32, 0.0
    %v42 = vadd.f32 %v40, %v41
    %v43 = vsel %vm39, %v33, 0.0
    %v44 = vadd.f32 %v42, %v43
    %v45 = vsel %vm39, %v34, 0.0
    %v46 = vadd.f32 %v44, %v45
    %v47 = vsel %vm39, %v35, 0.0
    %v48 = vsel %vm39, %v36, 0.0
    %v49 = vadd.f32 %v47, %v48
    %v50 = vsel %vm39, %v37, 0.0
    %v51 = vadd.f32 %v49, %v50
    %v52 = vsel %vm39, %v38, 0.0
    %v53 = vadd.f32 %v51, %v52
    %v54 = vadd.f32 %v46, 0.0
    %v55 = vadd.f32 %v53, 0.0
    %v56 = vadd.f32 %v54, 1.0
    %v57 = vadd.f32 %v55, 1.0
    %v58 = vrsqrt.pop %v54
    %v59 = vrsqrt.pop %v55
    %v60 = vmul.f32 %v56, %v58
    %v61 = vmul.f32 %v57, %v59
    %62 = vst [vmem:[#allocation5] sm:$0x3] %v60
    %63 = vst [vmem:[#allocation5 + $0x2] sm:$0x3] %v61
    // Predicated region
    $region10: #{tpu_custom_call.1} parent=1 // pred_check
      _
    $region11: #{tpu_custom_call.1} parent=1 // pred_check_branch
      %65 = sbr.rel (0) target = $region13
    $region12: #{tpu_custom_call.1} parent=1 // pred_region
      %s67 = ssub.s32 64, 64
      %68 = vsyncadd [#allocation4], %s67
      %s69 = sshll.u32 [#allocation5], 4
      %s70 = int_to_ptr.vmem [resolvable:$true] %s69
      %75 = dma.vmem_to_hbm [thread:$0]  %s70, 64, %s1, [#allocation4], 32, 32, 2
    $region13: #{tpu_custom_call.1} parent=1 // pred_fallthru
      _
    // Predicated region
    $region14: #{tpu_custom_call.1} parent=1 // pred_check
      _
    $region15: #{tpu_custom_call.1} parent=1 // pred_check_branch
      %77 = sbr.rel (0) target = $region17
    $region16: #{tpu_custom_call.1} parent=1 // pred_region
      %78 = dma.done [#allocation4], 64
    $region17: #{tpu_custom_call.1} parent=1 // pred_fallthru
      _
    %79 = vsyncpa [#allocation3], 1
    %80 = vsyncpa [#allocation4], 1

</llo_original>
